<compile_context>
chip_gen: v7x
topology: tpu7x:2x2x1
jax: 0.10.0
libtpu: 0.0.40
codegen_flags: <defaults>
</compile_context>

<pallas_src>
import functools

import jax
import jax.numpy as jnp
from jax.experimental import pallas as pl
from jax.experimental.pallas import tpu as pltpu

EPS_SISNR = 1e-8
_LANES = 128
_SUBLANES = 8
_BLOCK_BYTES_PER_INPUT = 1 * 1024 * 1024   # ~1 MiB / input / grid step


def _sisnr_moment_kernel(x_ref, s_ref, out_ref,
                         sx_ref, ss_ref, sxs_ref, sxx_ref, sss_ref,
                         *, true_t, rows_valid, s_tile, mask_last):
    """Streaming per-chunk moment accumulation + closed-form SI-SNR finalize.

    x_ref/s_ref: (s_tile, 128) tile of one batch row.  out_ref: (8, 128).
    Accumulator scratch: five (8, 128) f32 refs, reset at chunk 0, consumed at
    the last chunk of each batch row.
    """
    c = pl.program_id(1)
    nc = pl.num_programs(1)

    @pl.when(c == 0)
    def _init():
        for r in (sx_ref, ss_ref, sxs_ref, sxx_ref, sss_ref):
            r[...] = jnp.zeros_like(r)

    def accumulate(x, s):
        # Fold the sublane axis in groups of 8 (aligned with the (8,128) vreg
        # tiling, so the reshape is free) and reduce over the leading axis:
        # pure VALU vreg-adds into dense (8,128) accumulators.
        xr = x.reshape(s_tile // _SUBLANES, _SUBLANES, _LANES)
        sr = s.reshape(s_tile // _SUBLANES, _SUBLANES, _LANES)
        sx_ref[...] += jnp.sum(xr, axis=0)         # Σx
        ss_ref[...] += jnp.sum(sr, axis=0)         # Σs
        sxs_ref[...] += jnp.sum(xr * sr, axis=0)   # Σxs
        sxx_ref[...] += jnp.sum(xr * xr, axis=0)   # Σx²
        sss_ref[...] += jnp.sum(sr * sr, axis=0)   # Σs²

    if mask_last:
        # Full chunks never pay for the mask; only the final (partial) chunk
        # masks rows past the valid range (the zero lane-padding added in the
        # wrapper is already exact for all moments).
        @pl.when(c < nc - 1)
        def _full_tiles():
            accumulate(x_ref[...].astype(jnp.float32),
                       s_ref[...].astype(jnp.float32))

        @pl.when(c == nc - 1)
        def _last_tile():
            x = x_ref[...].astype(jnp.float32)
            s = s_ref[...].astype(jnp.float32)
            row = c * s_tile + jax.lax.broadcasted_iota(
                jnp.int32, (s_tile, _LANES), 0)
            valid = row < rows_valid
            accumulate(jnp.where(valid, x, 0.0), jnp.where(valid, s, 0.0))
    else:
        accumulate(x_ref[...].astype(jnp.float32),
                   s_ref[...].astype(jnp.float32))

    @pl.when(c == nc - 1)
    def _finalize():
        def tot(r):
            # (8,128) -> (1,1); stays vector-shaped (sublane then lane reduce).
            return jnp.sum(jnp.sum(r[...], axis=0, keepdims=True),
                           axis=1, keepdims=True)

        n = jnp.float32(true_t)
        sx, ss = tot(sx_ref), tot(ss_ref)
        sxs, sxx, sss = tot(sxs_ref), tot(sxx_ref), tot(sss_ref)

        dot = sxs - sx * ss / n            # <x_zm, s_zm>
        s_en = sss - ss * ss / n           # ||s_zm||²
        x_en = sxx - sx * sx / n           # ||x_zm||²

        alpha = dot / (s_en + EPS_SISNR)   # projection scale
        t_sq = alpha * alpha * s_en        # ||t||²
        e_sq = x_en - 2.0 * alpha * dot + t_sq   # ||x_zm - t||²

        t_norm = jnp.sqrt(jnp.maximum(t_sq, 0.0))
        e_norm = jnp.sqrt(jnp.maximum(e_sq, 0.0))
        sisnr = 20.0 * jnp.log10(EPS_SISNR + t_norm / (e_norm + EPS_SISNR))

        # Lane-dense broadcast store of the per-row sisnr.
        out_ref[...] = jnp.broadcast_to(sisnr, out_ref.shape).astype(jnp.float32)


def loss_aud_forward(pre, label, asd_pred=None, asd_gt=None, s_tile=None):
    """Equivalent of loss_aud().forward(pre, label) (asd_* default path)."""
    if pre.shape != label.shape:
        raise RuntimeError(
            'Dimention mismatch when calculate si-snr, {} vs {}'.format(
                pre.shape, label.shape))
    if asd_pred is not None and asd_gt is not None:
        # TODO(synk): asd frame-gating branch (data-dependent block assignment) not implemented.
        raise NotImplementedError(
            "asd_pred/asd_gt gating is not supported by the Pallas kernel")
    assert pre.ndim == 2, "expected [batch, samples] waveforms"
    B, T = pre.shape

    # Reshape [B, T] -> [B, rows, 128] so vregs are dense regardless of B.
    # Zero padding (only when T is not a multiple of 128, or T < 1024) is
    # exact for all five moments; the true T is used for the means.
    rows = max(_SUBLANES, int(pl.cdiv(T, _LANES)))
    t_pad = rows * _LANES

    def prep(a):
        if t_pad != T:
            a = jnp.pad(a, ((0, 0), (0, t_pad - T)))
        return a.reshape(B, rows, _LANES)

    x3, s3 = prep(pre), prep(label)
    itemsize = jnp.dtype(pre.dtype).itemsize

    # Tile rows: ~1 MiB per input per step (f32: 2048 rows, bf16: 4096 rows),
    # clamped to the (multiple-of-8) available rows.
    if s_tile is None:
        s_tile = _BLOCK_BYTES_PER_INPUT // (_LANES * itemsize)
    s_tile = max(_SUBLANES, (int(s_tile) // _SUBLANES) * _SUBLANES)
    s_tile = min(s_tile, (rows // _SUBLANES) * _SUBLANES)
    nc = int(pl.cdiv(rows, s_tile))
    mask_last = (rows % s_tile) != 0

    kernel = functools.partial(
        _sisnr_moment_kernel, true_t=T, rows_valid=rows,
        s_tile=s_tile, mask_last=mask_last)

    cost = pl.CostEstimate(
        flops=10 * B * t_pad,
        transcendentals=2 * B,
        bytes_accessed=2 * B * t_pad * itemsize + B * _SUBLANES * _LANES * 4)

    out = pl.pallas_call(
        kernel,
        out_shape=jax.ShapeDtypeStruct((B, _SUBLANES, _LANES), jnp.float32),
        grid_spec=pltpu.PrefetchScalarGridSpec(
            num_scalar_prefetch=0,
            grid=(B, nc),
            in_specs=[
                pl.BlockSpec((None, s_tile, _LANES), lambda b, c: (b, c, 0)),
                pl.BlockSpec((None, s_tile, _LANES), lambda b, c: (b, c, 0)),
            ],
            out_specs=pl.BlockSpec((None, _SUBLANES, _LANES),
                                   lambda b, c: (b, 0, 0)),
            scratch_shapes=[pltpu.VMEM((_SUBLANES, _LANES), jnp.float32)
                            for _ in range(5)],
        ),
        compiler_params=pltpu.CompilerParams(
            dimension_semantics=("parallel", "arbitrary"),
            vmem_limit_bytes=32 * 1024 * 1024),
        cost_estimate=cost,
    )(x3, s3)

    # Per-row sisnr lives (broadcast) in out[b]; forward(): -mean(sisnr).
    return -jnp.mean(out[:, 0, 0])


def _reference_loss(pre, label, eps=EPS_SISNR):
    """Pure-JAX reference mirroring the PyTorch code, for a sanity check."""
    x = pre.astype(jnp.float32)
    s = label.astype(jnp.float32)
    x_zm = x - jnp.mean(x, axis=-1, keepdims=True)
    s_zm = s - jnp.mean(s, axis=-1, keepdims=True)
    t = (jnp.sum(x_zm * s_zm, axis=-1, keepdims=True) * s_zm
         / (jnp.sum(s_zm ** 2, axis=-1, keepdims=True) + eps))
    l2 = lambda m: jnp.sqrt(jnp.sum(m * m, axis=-1))
    sisnr = 20.0 * jnp.log10(eps + l2(t) / (l2(x_zm - t) + eps))
    return -jnp.mean(sisnr)


if __name__ == "__main__":
    key = jax.random.PRNGKey(0)
    k1, k2 = jax.random.split(key)
    B, T = 2, 3000                       # small [batch, samples]; T % 128 != 0
    label = jax.random.normal(k1, (B, T), dtype=jnp.float32)              # clean
    pre = label + 0.2 * jax.random.normal(k2, (B, T), dtype=jnp.float32)  # est.

    ref = _reference_loss(pre, label)

    # Auto tile: one dense chunk per batch row (no masking).
    loss_auto = loss_aud_forward(pre, label)
    jax.block_until_ready(loss_auto)

    # Forced small tile: multi-chunk streaming + masked partial last chunk.
    loss_masked = loss_aud_forward(pre, label, s_tile=16)
    jax.block_until_ready(loss_masked)

    # Forced tiny tile: multi-chunk streaming, evenly divisible (no masking).
    loss_tiled = loss_aud_forward(pre, label, s_tile=8)
    jax.block_until_ready(loss_tiled)

    assert jnp.allclose(loss_auto, ref, rtol=1e-3, atol=1e-3), (loss_auto, ref)
    assert jnp.allclose(loss_masked, ref, rtol=1e-3, atol=1e-3), (loss_masked, ref)
    assert jnp.allclose(loss_tiled, ref, rtol=1e-3, atol=1e-3), (loss_tiled, ref)

    print("KERNEL_OK")
</pallas_src>

<mosaic_0001>
module attributes {stable_mosaic.version = 11 : i64} {
  func.func @_sisnr_moment_kernel(%arg0: i32, %arg1: i32, %arg2: memref<1x24x128xf32, #tpu.memory_space<vmem>>, %arg3: memref<1x24x128xf32, #tpu.memory_space<vmem>>, %arg4: memref<1x8x128xf32, #tpu.memory_space<vmem>>, %arg5: memref<8x128xf32, #tpu.memory_space<vmem>>, %arg6: memref<8x128xf32, #tpu.memory_space<vmem>>, %arg7: memref<8x128xf32, #tpu.memory_space<vmem>>, %arg8: memref<8x128xf32, #tpu.memory_space<vmem>>, %arg9: memref<8x128xf32, #tpu.memory_space<vmem>>) attributes {dimension_semantics = [#tpu.dimension_semantics<parallel>, #tpu.dimension_semantics<arbitrary>], iteration_bounds = array<i64: 2, 1>, scalar_prefetch = 0 : i64, scratch_operands = 5 : i64, tpu.core_type = #tpu.core_type<tc>, window_params = [{transform_indices = @transform_0, window_bounds = array<i64: 1, 24, 128>}, {transform_indices = @transform_1, window_bounds = array<i64: 1, 24, 128>}, {transform_indices = @transform_2, window_bounds = array<i64: 1, 8, 128>}]} {
    %c0_i32 = arith.constant 0 : i32
    %0 = arith.cmpi eq, %arg1, %c0_i32 : i32
    %1 = arith.extui %0 : i1 to i32
    %c0_i32_0 = arith.constant 0 : i32
    %2 = arith.cmpi ne, %1, %c0_i32_0 : i32
    scf.if %2 {
      %cst_32 = arith.constant 0.000000e+00 : f32
      %35 = vector.broadcast %cst_32 : f32 to vector<8x128xf32>
      %c0_33 = arith.constant 0 : index
      %c0_34 = arith.constant 0 : index
      %36 = vector.load %arg5[%c0_33, %c0_34] : memref<8x128xf32, #tpu.memory_space<vmem>>, vector<8x128xf32>
      tpu.vector_store %arg5[%c0_33, %c0_34], %35 {strides = array<i32>} : memref<8x128xf32, #tpu.memory_space<vmem>>, vector<8x128xf32>,
      %cst_35 = arith.constant 0.000000e+00 : f32
      %37 = vector.broadcast %cst_35 : f32 to vector<8x128xf32>
      %c0_36 = arith.constant 0 : index
      %c0_37 = arith.constant 0 : index
      %38 = vector.load %arg6[%c0_36, %c0_37] : memref<8x128xf32, #tpu.memory_space<vmem>>, vector<8x128xf32>
      tpu.vector_store %arg6[%c0_36, %c0_37], %37 {strides = array<i32>} : memref<8x128xf32, #tpu.memory_space<vmem>>, vector<8x128xf32>,
      %cst_38 = arith.constant 0.000000e+00 : f32
      %39 = vector.broadcast %cst_38 : f32 to vector<8x128xf32>
      %c0_39 = arith.constant 0 : index
      %c0_40 = arith.constant 0 : index
      %40 = vector.load %arg7[%c0_39, %c0_40] : memref<8x128xf32, #tpu.memory_space<vmem>>, vector<8x128xf32>
      tpu.vector_store %arg7[%c0_39, %c0_40], %39 {strides = array<i32>} : memref<8x128xf32, #tpu.memory_space<vmem>>, vector<8x128xf32>,
      %cst_41 = arith.constant 0.000000e+00 : f32
      %41 = vector.broadcast %cst_41 : f32 to vector<8x128xf32>
      %c0_42 = arith.constant 0 : index
      %c0_43 = arith.constant 0 : index
      %42 = vector.load %arg8[%c0_42, %c0_43] : memref<8x128xf32, #tpu.memory_space<vmem>>, vector<8x128xf32>
      tpu.vector_store %arg8[%c0_42, %c0_43], %41 {strides = array<i32>} : memref<8x128xf32, #tpu.memory_space<vmem>>, vector<8x128xf32>,
      %cst_44 = arith.constant 0.000000e+00 : f32
      %43 = vector.broadcast %cst_44 : f32 to vector<8x128xf32>
      %c0_45 = arith.constant 0 : index
      %c0_46 = arith.constant 0 : index
      %44 = vector.load %arg9[%c0_45, %c0_46] : memref<8x128xf32, #tpu.memory_space<vmem>>, vector<8x128xf32>
      tpu.vector_store %arg9[%c0_45, %c0_46], %43 {strides = array<i32>} : memref<8x128xf32, #tpu.memory_space<vmem>>, vector<8x128xf32>,
    } else {
    }
    %c0 = arith.constant 0 : index
    %c0_1 = arith.constant 0 : index
    %c0_2 = arith.constant 0 : index
    %3 = vector.load %arg2[%c0, %c0_1, %c0_2] : memref<1x24x128xf32, #tpu.memory_space<vmem>>, vector<1x24x128xf32>
    %4 = vector.shape_cast %3 : vector<1x24x128xf32> to vector<24x128xf32>
    %c0_3 = arith.constant 0 : index
    %c0_4 = arith.constant 0 : index
    %c0_5 = arith.constant 0 : index
    %5 = vector.load %arg3[%c0_3, %c0_4, %c0_5] : memref<1x24x128xf32, #tpu.memory_space<vmem>>, vector<1x24x128xf32>
    %6 = vector.shape_cast %5 : vector<1x24x128xf32> to vector<24x128xf32>
    %7 = vector.shape_cast %4 : vector<24x128xf32> to vector<3x8x128xf32>
    %8 = vector.shape_cast %6 : vector<24x128xf32> to vector<3x8x128xf32>
    %c0_6 = arith.constant 0 : index
    %c0_7 = arith.constant 0 : index
    %9 = vector.load %arg5[%c0_6, %c0_7] : memref<8x128xf32, #tpu.memory_space<vmem>>, vector<8x128xf32>
    %cst = arith.constant dense<0.000000e+00> : vector<8x128xf32>
    %10 = vector.multi_reduction <add>, %7, %cst [0] : vector<3x8x128xf32> to vector<8x128xf32>
    %11 = arith.addf %9, %10 : vector<8x128xf32>
    %c0_8 = arith.constant 0 : index
    %c0_9 = arith.constant 0 : index
    %12 = vector.load %arg5[%c0_8, %c0_9] : memref<8x128xf32, #tpu.memory_space<vmem>>, vector<8x128xf32>
    tpu.vector_store %arg5[%c0_8, %c0_9], %11 {strides = array<i32>} : memref<8x128xf32, #tpu.memory_space<vmem>>, vector<8x128xf32>,
    %c0_10 = arith.constant 0 : index
    %c0_11 = arith.constant 0 : index
    %13 = vector.load %arg6[%c0_10, %c0_11] : memref<8x128xf32, #tpu.memory_space<vmem>>, vector<8x128xf32>
    %cst_12 = arith.constant dense<0.000000e+00> : vector<8x128xf32>
    %14 = vector.multi_reduction <add>, %8, %cst_12 [0] : vector<3x8x128xf32> to vector<8x128xf32>
    %15 = arith.addf %13, %14 : vector<8x128xf32>
    %c0_13 = arith.constant 0 : index
    %c0_14 = arith.constant 0 : index
    %16 = vector.load %arg6[%c0_13, %c0_14] : memref<8x128xf32, #tpu.memory_space<vmem>>, vector<8x128xf32>
    tpu.vector_store %arg6[%c0_13, %c0_14], %15 {strides = array<i32>} : memref<8x128xf32, #tpu.memory_space<vmem>>, vector<8x128xf32>,
    %c0_15 = arith.constant 0 : index
    %c0_16 = arith.constant 0 : index
    %17 = vector.load %arg7[%c0_15, %c0_16] : memref<8x128xf32, #tpu.memory_space<vmem>>, vector<8x128xf32>
    %18 = arith.mulf %7, %8 : vector<3x8x128xf32>
    %cst_17 = arith.constant dense<0.000000e+00> : vector<8x128xf32>
    %19 = vector.multi_reduction <add>, %18, %cst_17 [0] : vector<3x8x128xf32> to vector<8x128xf32>
    %20 = arith.addf %17, %19 : vector<8x128xf32>
    %c0_18 = arith.constant 0 : index
    %c0_19 = arith.constant 0 : index
    %21 = vector.load %arg7[%c0_18, %c0_19] : memref<8x128xf32, #tpu.memory_space<vmem>>, vector<8x128xf32>
    tpu.vector_store %arg7[%c0_18, %c0_19], %20 {strides = array<i32>} : memref<8x128xf32, #tpu.memory_space<vmem>>, vector<8x128xf32>,
    %c0_20 = arith.constant 0 : index
    %c0_21 = arith.constant 0 : index
    %22 = vector.load %arg8[%c0_20, %c0_21] : memref<8x128xf32, #tpu.memory_space<vmem>>, vector<8x128xf32>
    %23 = arith.mulf %7, %7 : vector<3x8x128xf32>
    %cst_22 = arith.constant dense<0.000000e+00> : vector<8x128xf32>
    %24 = vector.multi_reduction <add>, %23, %cst_22 [0] : vector<3x8x128xf32> to vector<8x128xf32>
    %25 = arith.addf %22, %24 : vector<8x128xf32>
    %c0_23 = arith.constant 0 : index
    %c0_24 = arith.constant 0 : index
    %26 = vector.load %arg8[%c0_23, %c0_24] : memref<8x128xf32, #tpu.memory_space<vmem>>, vector<8x128xf32>
    tpu.vector_store %arg8[%c0_23, %c0_24], %25 {strides = array<i32>} : memref<8x128xf32, #tpu.memory_space<vmem>>, vector<8x128xf32>,
    %c0_25 = arith.constant 0 : index
    %c0_26 = arith.constant 0 : index
    %27 = vector.load %arg9[%c0_25, %c0_26] : memref<8x128xf32, #tpu.memory_space<vmem>>, vector<8x128xf32>
    %28 = arith.mulf %8, %8 : vector<3x8x128xf32>
    %cst_27 = arith.constant dense<0.000000e+00> : vector<8x128xf32>
    %29 = vector.multi_reduction <add>, %28, %cst_27 [0] : vector<3x8x128xf32> to vector<8x128xf32>
    %30 = arith.addf %27, %29 : vector<8x128xf32>
    %c0_28 = arith.constant 0 : index
    %c0_29 = arith.constant 0 : index
    %31 = vector.load %arg9[%c0_28, %c0_29] : memref<8x128xf32, #tpu.memory_space<vmem>>, vector<8x128xf32>
    tpu.vector_store %arg9[%c0_28, %c0_29], %30 {strides = array<i32>} : memref<8x128xf32, #tpu.memory_space<vmem>>, vector<8x128xf32>,
    %c0_i32_30 = arith.constant 0 : i32
    %32 = arith.cmpi eq, %arg1, %c0_i32_30 : i32
    %33 = arith.extui %32 : i1 to i32
    %c0_i32_31 = arith.constant 0 : i32
    %34 = arith.cmpi ne, %33, %c0_i32_31 : i32
    scf.if %34 {
      %c0_32 = arith.constant 0 : index
      %c0_33 = arith.constant 0 : index
      %35 = vector.load %arg5[%c0_32, %c0_33] : memref<8x128xf32, #tpu.memory_space<vmem>>, vector<8x128xf32>
      %cst_34 = arith.constant dense<0.000000e+00> : vector<128xf32>
      %36 = vector.multi_reduction <add>, %35, %cst_34 [0] : vector<8x128xf32> to vector<128xf32>
      %37 = vector.shape_cast %36 : vector<128xf32> to vector<1x128xf32>
      %cst_35 = arith.constant dense<0.000000e+00> : vector<1xf32>
      %38 = vector.multi_reduction <add>, %37, %cst_35 [1] : vector<1x128xf32> to vector<1xf32>
      %39 = vector.shape_cast %38 : vector<1xf32> to vector<1x1xf32>
      %c0_36 = arith.constant 0 : index
      %c0_37 = arith.constant 0 : index
      %40 = vector.load %arg6[%c0_36, %c0_37] : memref<8x128xf32, #tpu.memory_space<vmem>>, vector<8x128xf32>
      %cst_38 = arith.constant dense<0.000000e+00> : vector<128xf32>
      %41 = vector.multi_reduction <add>, %40, %cst_38 [0] : vector<8x128xf32> to vector<128xf32>
      %42 = vector.shape_cast %41 : vector<128xf32> to vector<1x128xf32>
      %cst_39 = arith.constant dense<0.000000e+00> : vector<1xf32>
      %43 = vector.multi_reduction <add>, %42, %cst_39 [1] : vector<1x128xf32> to vector<1xf32>
      %44 = vector.shape_cast %43 : vector<1xf32> to vector<1x1xf32>
      %c0_40 = arith.constant 0 : index
      %c0_41 = arith.constant 0 : index
      %45 = vector.load %arg7[%c0_40, %c0_41] : memref<8x128xf32, #tpu.memory_space<vmem>>, vector<8x128xf32>
      %cst_42 = arith.constant dense<0.000000e+00> : vector<128xf32>
      %46 = vector.multi_reduction <add>, %45, %cst_42 [0] : vector<8x128xf32> to vector<128xf32>
      %47 = vector.shape_cast %46 : vector<128xf32> to vector<1x128xf32>
      %cst_43 = arith.constant dense<0.000000e+00> : vector<1xf32>
      %48 = vector.multi_reduction <add>, %47, %cst_43 [1] : vector<1x128xf32> to vector<1xf32>
      %49 = vector.shape_cast %48 : vector<1xf32> to vector<1x1xf32>
      %c0_44 = arith.constant 0 : index
      %c0_45 = arith.constant 0 : index
      %50 = vector.load %arg8[%c0_44, %c0_45] : memref<8x128xf32, #tpu.memory_space<vmem>>, vector<8x128xf32>
      %cst_46 = arith.constant dense<0.000000e+00> : vector<128xf32>
      %51 = vector.multi_reduction <add>, %50, %cst_46 [0] : vector<8x128xf32> to vector<128xf32>
      %52 = vector.shape_cast %51 : vector<128xf32> to vector<1x128xf32>
      %cst_47 = arith.constant dense<0.000000e+00> : vector<1xf32>
      %53 = vector.multi_reduction <add>, %52, %cst_47 [1] : vector<1x128xf32> to vector<1xf32>
      %54 = vector.shape_cast %53 : vector<1xf32> to vector<1x1xf32>
      %c0_48 = arith.constant 0 : index
      %c0_49 = arith.constant 0 : index
      %55 = vector.load %arg9[%c0_48, %c0_49] : memref<8x128xf32, #tpu.memory_space<vmem>>, vector<8x128xf32>
      %cst_50 = arith.constant dense<0.000000e+00> : vector<128xf32>
      %56 = vector.multi_reduction <add>, %55, %cst_50 [0] : vector<8x128xf32> to vector<128xf32>
      %57 = vector.shape_cast %56 : vector<128xf32> to vector<1x128xf32>
      %cst_51 = arith.constant dense<0.000000e+00> : vector<1xf32>
      %58 = vector.multi_reduction <add>, %57, %cst_51 [1] : vector<1x128xf32> to vector<1xf32>
      %59 = vector.shape_cast %58 : vector<1xf32> to vector<1x1xf32>
      %60 = arith.mulf %39, %44 : vector<1x1xf32>
      %cst_52 = arith.constant 3.000000e+03 : f32
      %61 = vector.broadcast %cst_52 : f32 to vector<1x1xf32>
      %62 = arith.divf %60, %61 : vector<1x1xf32>
      %63 = arith.subf %49, %62 : vector<1x1xf32>
      %64 = arith.mulf %44, %44 : vector<1x1xf32>
      %cst_53 = arith.constant 3.000000e+03 : f32
      %65 = vector.broadcast %cst_53 : f32 to vector<1x1xf32>
      %66 = arith.divf %64, %65 : vector<1x1xf32>
      %67 = arith.subf %59, %66 : vector<1x1xf32>
      %68 = arith.mulf %39, %39 : vector<1x1xf32>
      %cst_54 = arith.constant 3.000000e+03 : f32
      %69 = vector.broadcast %cst_54 : f32 to vector<1x1xf32>
      %70 = arith.divf %68, %69 : vector<1x1xf32>
      %71 = arith.subf %54, %70 : vector<1x1xf32>
      %cst_55 = arith.constant 9.99999993E-9 : f32
      %72 = vector.broadcast %cst_55 : f32 to vector<1x1xf32>
      %73 = arith.addf %67, %72 : vector<1x1xf32>
      %74 = arith.divf %63, %73 : vector<1x1xf32>
      %75 = arith.mulf %74, %74 : vector<1x1xf32>
      %76 = arith.mulf %75, %67 : vector<1x1xf32>
      %cst_56 = arith.constant 2.000000e+00 : f32
      %77 = vector.broadcast %cst_56 : f32 to vector<1x1xf32>
      %78 = arith.mulf %77, %74 : vector<1x1xf32>
      %79 = arith.mulf %78, %63 : vector<1x1xf32>
      %80 = arith.subf %71, %79 : vector<1x1xf32>
      %81 = arith.addf %80, %76 : vector<1x1xf32>
      %cst_57 = arith.constant 0.000000e+00 : f32
      %82 = vector.broadcast %cst_57 : f32 to vector<1x1xf32>
      %83 = arith.maximumf %76, %82 : vector<1x1xf32>
      %84 = math.sqrt %83 : vector<1x1xf32>
      %cst_58 = arith.constant 0.000000e+00 : f32
      %85 = vector.broadcast %cst_58 : f32 to vector<1x1xf32>
      %86 = arith.maximumf %81, %85 : vector<1x1xf32>
      %87 = math.sqrt %86 : vector<1x1xf32>
      %cst_59 = arith.constant 9.99999993E-9 : f32
      %88 = vector.broadcast %cst_59 : f32 to vector<1x1xf32>
      %89 = arith.addf %87, %88 : vector<1x1xf32>
      %90 = arith.divf %84, %89 : vector<1x1xf32>
      %cst_60 = arith.constant 9.99999993E-9 : f32
      %91 = vector.broadcast %cst_60 : f32 to vector<1x1xf32>
      %92 = arith.addf %91, %90 : vector<1x1xf32>
      %93 = math.log %92 : vector<1x1xf32>
      %cst_61 = arith.constant 0.434294492 : f32
      %94 = vector.broadcast %cst_61 : f32 to vector<1x1xf32>
      %95 = arith.mulf %93, %94 : vector<1x1xf32>
      %cst_62 = arith.constant 2.000000e+01 : f32
      %96 = vector.broadcast %cst_62 : f32 to vector<1x1xf32>
      %97 = arith.mulf %96, %95 : vector<1x1xf32>
      %98 = vector.shape_cast %97 : vector<1x1xf32> to vector<1x1xf32>
      %99 = vector.broadcast %98 : vector<1x1xf32> to vector<8x128xf32>
      %c0_63 = arith.constant 0 : index
      %c0_64 = arith.constant 0 : index
      %c0_65 = arith.constant 0 : index
      %100 = vector.load %arg4[%c0_63, %c0_64, %c0_65] : memref<1x8x128xf32, #tpu.memory_space<vmem>>, vector<1x8x128xf32>
      %101 = vector.shape_cast %100 : vector<1x8x128xf32> to vector<8x128xf32>
      %102 = vector.shape_cast %99 : vector<8x128xf32> to vector<1x8x128xf32>
      tpu.vector_store %arg4[%c0_63, %c0_64, %c0_65], %102 {strides = array<i32>} : memref<1x8x128xf32, #tpu.memory_space<vmem>>, vector<1x8x128xf32>,
    } else {
    }
    return
  }
  func.func @transform_0(%arg0: i32, %arg1: i32) -> (i32, i32, i32) {
    %c0_i32 = arith.constant 0 : i32
    %c0_i32_0 = arith.constant 0 : i32
    return %arg0, %arg1, %c0_i32 : i32, i32, i32
  }
  func.func @transform_1(%arg0: i32, %arg1: i32) -> (i32, i32, i32) {
    %c0_i32 = arith.constant 0 : i32
    %c0_i32_0 = arith.constant 0 : i32
    return %arg0, %arg1, %c0_i32 : i32, i32, i32
  }
  func.func @transform_2(%arg0: i32, %arg1: i32) -> (i32, i32, i32) {
    %c0_i32 = arith.constant 0 : i32
    %c0_i32_0 = arith.constant 0 : i32
    %c0_i32_1 = arith.constant 0 : i32
    return %arg0, %c0_i32, %c0_i32_0 : i32, i32, i32
  }
}

</mosaic_0001>

<llo_original>
// kernel: tpu_custom_call.1
$region0: #{tpu_custom_call.1}
  #allocation0 [shape = 'u32[]', space=smem, size = 0x4, offset = 0x4, fixed_abs, tag = 'smem constant byte address 0x4 - core index']
  #allocation1 [shape = 'u32[144,128]{1,0:T(1,128)}', space=vmem, size = 0x12000, scoped, tag = 'internal scratch']
  #allocation2 [shape = 'f32[8,128]{1,0:T(8,128)}', space=vmem, size = 0x1000, scoped, tag = 'scratch operand']
  #allocation3 [shape = 'f32[8,128]{1,0:T(8,128)}', space=vmem, size = 0x1000, scoped, tag = 'scratch operand']
  #allocation4 [shape = 'f32[8,128]{1,0:T(8,128)}', space=vmem, size = 0x1000, scoped, tag = 'scratch operand']
  #allocation5 [shape = 'f32[8,128]{1,0:T(8,128)}', space=vmem, size = 0x1000, scoped, tag = 'scratch operand']
  #allocation6 [shape = 'f32[8,128]{1,0:T(8,128)}', space=vmem, size = 0x1000, scoped, tag = 'scratch operand']
  %s0 = inlined_call_operand.hbm [shape: f32[2,24,128], index: 0, kind: input, shape index: {}]
  %s1 = inlined_call_operand.hbm [shape: f32[2,24,128], index: 1, kind: input, shape index: {}]
  %s2 = inlined_call_operand.hbm [shape: f32[2,8,128], index: 2, kind: output, shape index: {}]
  %s3 = sld [smem:[#allocation0]]
  $region57: #{tpu_custom_call.1} parent=0
    _
  %s5 = ssub.s32 1, %s3
  %s6 = scalar_select 0, %s5, %s3
  $region1: #{tpu_custom_call.1} parent=0
    #allocation7 [shape = 'u8[24576]{0}', space=vmem, size = 0x6000, scoped, tag = 'input window, operand 0']
    #allocation8 [shape = 's32[2]{0}', space=sflag, size = 0x8, scoped, tag = 'scoped memory for tpu_custom_call.1']
    #allocation9 [shape = 's32[2]{0}', space=sflag, size = 0x8, scoped, tag = 'scoped memory for tpu_custom_call.1']
    #allocation10 [shape = 'u8[24576]{0}', space=vmem, size = 0x6000, scoped, tag = 'input window, operand 1']
    #allocation11 [shape = 's32[2]{0}', space=sflag, size = 0x8, scoped, tag = 'scoped memory for tpu_custom_call.1']
    #allocation12 [shape = 'u8[8192]{0}', space=vmem, size = 0x2000, scoped, tag = 'output window, operand 0']
    %7 = vsyncpa [#allocation8], 0
    %s8 = scalar_lea.sflag [#allocation8], 1
    %9 = vsyncpa %s8, 0
    %10 = vsyncpa [#allocation11], 0
    %s11 = scalar_lea.sflag [#allocation11], 1
    %12 = vsyncpa %s11, 0
    %13 = vsyncpa [#allocation9], 0
    %s14 = scalar_lea.sflag [#allocation9], 1
    %15 = vsyncpa %s14, 0
    loop: start=0, step=1, limit=4
    $region2: #{tpu_custom_call.1} parent=1 // loop_pre_header
      _
    $region3: #{tpu_custom_call.1} parent=1 // loop_header
      %s17 = sphi 0, %s21
      %p18 = scmp.ge.s32.totalorder %s17, 4
      %s24 = sphi 0, %s36
      %s25 = sphi 0, %s32
      %s26 = sphi 0, %s24
      %s27 = sphi 0, %s25
      %s28 = sphi 0, %s26
      %s29 = sphi 0, %s27
      %s41 = sphi 0, %s43
      %s44 = sphi 0, %s41
      %s45 = sphi 0, %s44
      %s61 = sphi 0, %s45
      %s69 = sphi 0, %s71
      %s72 = sphi 0, %s69
      %s73 = sphi 0, %s72
      %s89 = sphi 0, %s73
      %s95 = sphi 0, %s97
      %s98 = sphi 0, %s95
      %s99 = sphi 0, %s98
      %s115 = sphi 0, %s99
    $region4: #{tpu_custom_call.1} parent=1 // loop_header_branch
      %20 = sbr.rel (%p18) target = $region8
    $region5: #{tpu_custom_call.1} parent=1 // loop_body
      %s22 = ssub.s32 %s17, 1
      %s23 = ssub.s32 %s17, 2
      %s30 = sadd.s32 1, %s25
      %p31 = scmp.ge.s32.totalorder %s30, 1
      %s32 = scalar_select %p31, 0, %s30
      %s33 = sadd.s32 1, %s24
      %s34 = scalar_select %p31, %s33, %s24
      %p35 = scmp.ge.s32.totalorder %s34, 2
      %s36 = scalar_select %p35, 0, %s34
      %s37 = ssub.s32 %s24, %s36
      %s38 = ssub.s32 %s25, %s32
      %s39 = sor.u32 %s37, %s38
      %p40 = scmp.eq.s32.totalorder %s39, 0
      %s42 = sadd.s32 %s41, 1
      %s43 = scalar_select %p40, %s41, %s42
      %p46 = pneg %p40
      %p47 = scmp.eq.s32.totalorder %s17, 1
      %p48 = por %p46, %p47
      %p49 = scmp.ne.s32.totalorder %s41, %s44
      %p50 = scmp.eq.s32.totalorder %s17, 0
      %p51 = por %p49, %p50
      %p52 = scmp.ne.s32.totalorder %s41, %s44
      %p53 = scmp.eq.s32.totalorder %s22, 1
      %p54 = por %p52, %p53
      %p55 = scmp.ne.s32.totalorder %s44, %s45
      %p56 = scmp.eq.s32.totalorder %s22, 0
      %p57 = por %p55, %p56
      %p58 = scmp.ne.s32.totalorder %s44, %s45
      %p59 = scmp.eq.s32.totalorder %s23, 1
      %p60 = por %p58, %p59
      %p62 = scmp.ne.s32.totalorder %s45, %s61
      %p63 = scmp.eq.s32.totalorder %s23, 0
      %p64 = por %p62, %p63
      %s65 = ssub.s32 %s24, %s36
      %s66 = ssub.s32 %s25, %s32
      %s67 = sor.u32 %s65, %s66
      %p68 = scmp.eq.s32.totalorder %s67, 0
      %s70 = sadd.s32 %s69, 1
      %s71 = scalar_select %p68, %s69, %s70
      %p74 = pneg %p68
      %p75 = scmp.eq.s32.totalorder %s17, 1
      %p76 = por %p74, %p75
      %p77 = scmp.ne.s32.totalorder %s69, %s72
      %p78 = scmp.eq.s32.totalorder %s17, 0
      %p79 = por %p77, %p78
      %p80 = scmp.ne.s32.totalorder %s69, %s72
      %p81 = scmp.eq.s32.totalorder %s22, 1
      %p82 = por %p80, %p81
      %p83 = scmp.ne.s32.totalorder %s72, %s73
      %p84 = scmp.eq.s32.totalorder %s22, 0
      %p85 = por %p83, %p84
      %p86 = scmp.ne.s32.totalorder %s72, %s73
      %p87 = scmp.eq.s32.totalorder %s23, 1
      %p88 = por %p86, %p87
      %p90 = scmp.ne.s32.totalorder %s73, %s89
      %p91 = scmp.eq.s32.totalorder %s23, 0
      %p92 = por %p90, %p91
      %s93 = ssub.s32 %s24, %s36
      %p94 = scmp.eq.s32.totalorder %s93, 0
      %s96 = sadd.s32 %s95, 1
      %s97 = scalar_select %p94, %s95, %s96
      %p100 = pneg %p94
      %p101 = scmp.eq.s32.totalorder %s17, 1
      %p102 = por %p100, %p101
      %p103 = scmp.ne.s32.totalorder %s95, %s98
      %p104 = scmp.eq.s32.totalorder %s17, 0
      %p105 = por %p103, %p104
      %p106 = scmp.ne.s32.totalorder %s95, %s98
      %p107 = scmp.eq.s32.totalorder %s22, 1
      %p108 = por %p106, %p107
      %p109 = scmp.ne.s32.totalorder %s98, %s99
      %p110 = scmp.eq.s32.totalorder %s22, 0
      %p111 = por %p109, %p110
      %p112 = scmp.ne.s32.totalorder %s98, %s99
      %p113 = scmp.eq.s32.totalorder %s23, 1
      %p114 = por %p112, %p113
      %p116 = scmp.ne.s32.totalorder %s99, %s115
      %p117 = scmp.eq.s32.totalorder %s23, 0
      %p118 = por %p116, %p117
      %p119 = scmp.le.s32.totalorder 1, %s17
      %p120 = scmp.lt.s32.totalorder %s17, 3
      %p121 = pnand %p119, %p120
      %p122 = pneg %p121
      // Predicated region
      $region9: #{tpu_custom_call.1} parent=5 // pred_check
        _
      $region10: #{tpu_custom_call.1} parent=5 // pred_check_branch
        %124 = sbr.rel (%p121) target = $region12
      $region11: #{tpu_custom_call.1} parent=5 // pred_region
        %s125 = ssub.s32 %s17, 1
      $region12: #{tpu_custom_call.1} parent=5 // pred_fallthru
        _
      %p126 = scmp.lt.s32.totalorder %s17, 2
      // Predicated region
      $region13: #{tpu_custom_call.1} parent=5 // pred_check
        %p127 = pneg %p126
      $region14: #{tpu_custom_call.1} parent=5 // pred_check_branch
        %129 = sbr.rel (%p127) target = $region16
      $region15: #{tpu_custom_call.1} parent=5 // pred_region
        // Predicated region
        $region17: #{tpu_custom_call.1} parent=15 // pred_check
          %p130 = pneg %p51
        $region18: #{tpu_custom_call.1} parent=15 // pred_check_branch
          %132 = sbr.rel (%p130) target = $region20
        $region19: #{tpu_custom_call.1} parent=15 // pred_region
          %s133 = sand.u32 %s41, 1
          %s134 = scalar_lea.sflag [#allocation8], %s133
          %s135 = sand.u32 %s41, 1
          %s136 = smul.addr %s135, 24
          %s137 = scalar_lea.vmem [#allocation7], %s136
          %s138 = smul.u32 3, %s25
          %s140 = ssub.s32 384, 384
          %141 = vsyncadd %s134, %s140
          %s142 = smul.addr %s24, 3
          %s143 = sadd.s32 %s138, %s142
          %s144 = smul.addr %s143, 128
          %s145 = scalar_lea.hbm %s0, %s144
          %s146 = sshll.u32 %s137, 4
          %s147 = int_to_ptr.vmem [resolvable:$true] %s146
          %152 = dma.hbm_to_vmem [thread:$0]  %s145, 384, %s147, %s134, 128, 128, 8
        $region20: #{tpu_custom_call.1} parent=15 // pred_fallthru
          _
        // Predicated region
        $region21: #{tpu_custom_call.1} parent=15 // pred_check
          %p153 = pneg %p79
        $region22: #{tpu_custom_call.1} parent=15 // pred_check_branch
          %155 = sbr.rel (%p153) target = $region24
        $region23: #{tpu_custom_call.1} parent=15 // pred_region
          %s156 = sand.u32 %s69, 1
          %s157 = scalar_lea.sflag [#allocation11], %s156
          %s158 = sand.u32 %s69, 1
          %s159 = smul.addr %s158, 24
          %s160 = scalar_lea.vmem [#allocation10], %s159
          %s161 = smul.u32 3, %s25
          %s163 = ssub.s32 384, 384
          %164 = vsyncadd %s157, %s163
          %s165 = smul.addr %s24, 3
          %s166 = sadd.s32 %s161, %s165
          %s167 = smul.addr %s166, 128
          %s168 = scalar_lea.hbm %s1, %s167
          %s169 = sshll.u32 %s160, 4
          %s170 = int_to_ptr.vmem [resolvable:$true] %s169
          %175 = dma.hbm_to_vmem [thread:$0]  %s168, 384, %s170, %s157, 128, 128, 8
        $region24: #{tpu_custom_call.1} parent=15 // pred_fallthru
          _
      $region16: #{tpu_custom_call.1} parent=5 // pred_fallthru
        _
      %p176 = scmp.le.s32.totalorder 1, %s17
      %p177 = scmp.lt.s32.totalorder %s17, 3
      %p178 = pnand %p176, %p177
      %p179 = pneg %p178
      // Predicated region
      $region25: #{tpu_custom_call.1} parent=5 // pred_check
        _
      $region26: #{tpu_custom_call.1} parent=5 // pred_check_branch
        %181 = sbr.rel (%p178) target = $region28
      $region27: #{tpu_custom_call.1} parent=5 // pred_region
        %s182 = ssub.s32 %s17, 1
        %s183 = sand.u32 %s44, 1
        %s184 = scalar_lea.sflag [#allocation8], %s183
        %s185 = sand.u32 %s44, 1
        %s186 = smul.addr %s185, 24
        %s187 = scalar_lea.vmem [#allocation7], %s186
        // Predicated region
        $region29: #{tpu_custom_call.1} parent=27 // pred_check
          %p188 = pneg %p57
        $region30: #{tpu_custom_call.1} parent=27 // pred_check_branch
          %190 = sbr.rel (%p188) target = $region32
        $region31: #{tpu_custom_call.1} parent=27 // pred_region
          %191 = dma.done %s184, 384
        $region32: #{tpu_custom_call.1} parent=27 // pred_fallthru
          _
        %s192 = sand.u32 %s72, 1
        %s193 = scalar_lea.sflag [#allocation11], %s192
        %s194 = sand.u32 %s72, 1
        %s195 = smul.addr %s194, 24
        %s196 = scalar_lea.vmem [#allocation10], %s195
        // Predicated region
        $region33: #{tpu_custom_call.1} parent=27 // pred_check
          %p197 = pneg %p85
        $region34: #{tpu_custom_call.1} parent=27 // pred_check_branch
          %199 = sbr.rel (%p197) target = $region36
        $region35: #{tpu_custom_call.1} parent=27 // pred_region
          %200 = dma.done %s193, 384
        $region36: #{tpu_custom_call.1} parent=27 // pred_fallthru
          _
        %s201 = sand.u32 %s44, 1
        %s202 = scalar_lea.sflag [#allocation8], %s201
        %s203 = sand.u32 %s44, 1
        %s204 = smul.addr %s203, 24
        %s205 = scalar_lea.vmem [#allocation7], %s204
        %p206 = pneg %p57
        %p207 = pneg %p54
        %s208 = sand.u32 %s72, 1
        %s209 = scalar_lea.sflag [#allocation11], %s208
        %s210 = sand.u32 %s72, 1
        %s211 = smul.addr %s210, 24
        %s212 = scalar_lea.vmem [#allocation10], %s211
        %p213 = pneg %p85
        %p214 = pneg %p82
        %p215 = pneg %p111
        %p216 = pneg %p108
        %s217 = sand.u32 %s98, 1
        %s218 = scalar_lea.sflag [#allocation9], %s217
        %s219 = sand.u32 %s98, 1
        %s220 = smul.addr %s219, 8
        %s221 = scalar_lea.vmem [#allocation12], %s220
        %s222 = smul.u32 3, %s27
        %s223 = smul.u32 3, %s27
        %p224 = scmp.eq.s32.totalorder %s27, 0
        // Predicated region
        $region37: #{tpu_custom_call.1} parent=27 // pred_check
          %p225 = pneg %p224
        $region38: #{tpu_custom_call.1} parent=27 // pred_check_branch
          %227 = sbr.rel (%p225) target = $region40
        $region39: #{tpu_custom_call.1} parent=27 // pred_region
          %228 = vst [vmem:[#allocation2] sm:$0xff] 0.0
          %229 = vst [vmem:[#allocation3] sm:$0xff] 0.0
          %230 = vst [vmem:[#allocation4] sm:$0xff] 0.0
          %231 = vst [vmem:[#allocation5] sm:$0xff] 0.0
          %232 = vst [vmem:[#allocation6] sm:$0xff] 0.0
        $region40: #{tpu_custom_call.1} parent=27 // pred_fallthru
          _
        %v233 = vld [vmem:[%s187] sm:$0xff]
        %v234 = vld [vmem:[%s187 + $0x8] sm:$0xff]
        %v235 = vld [vmem:[%s187 + $0x10] sm:$0xff]
        %v236 = vld [vmem:[%s196] sm:$0xff]
        %v237 = vld [vmem:[%s196 + $0x8] sm:$0xff]
        %v238 = vld [vmem:[%s196 + $0x10] sm:$0xff]
        %v239 = vld [vmem:[#allocation2] sm:$0xff]
        %v240 = vadd.f32 %v233, %v234
        %v241 = vadd.f32 %v240, %v235
        %v242 = vadd.f32 %v239, %v241
        %243 = vst [vmem:[#allocation2] sm:$0xff] %v242
        %v244 = vld [vmem:[#allocation3] sm:$0xff]
        %v245 = vadd.f32 %v236, %v237
        %v246 = vadd.f32 %v245, %v238
        %v247 = vadd.f32 %v244, %v246
        %248 = vst [vmem:[#allocation3] sm:$0xff] %v247
        %v249 = vld [vmem:[#allocation4] sm:$0xff]
        %v250 = vmul.f32 %v233, %v236
        %v251 = vmul.f32 %v234, %v237
        %v252 = vmul.f32 %v235, %v238
        %v253 = vadd.f32 %v250, %v251
        %v254 = vadd.f32 %v253, %v252
        %v255 = vadd.f32 %v249, %v254
        %256 = vst [vmem:[#allocation4] sm:$0xff] %v255
        %v257 = vld [vmem:[#allocation5] sm:$0xff]
        %v258 = vmul.f32 %v233, %v233
        %v259 = vmul.f32 %v234, %v234
        %v260 = vmul.f32 %v235, %v235
        %v261 = vadd.f32 %v258, %v259
        %v262 = vadd.f32 %v261, %v260
        %v263 = vadd.f32 %v257, %v262
        %264 = vst [vmem:[#allocation5] sm:$0xff] %v263
        %v265 = vld [vmem:[#allocation6] sm:$0xff]
        %v266 = vmul.f32 %v236, %v236
        %v267 = vmul.f32 %v237, %v237
        %v268 = vmul.f32 %v238, %v238
        %v269 = vadd.f32 %v266, %v267
        %v270 = vadd.f32 %v269, %v268
        %v271 = vadd.f32 %v265, %v270
        %272 = vst [vmem:[#allocation6] sm:$0xff] %v271
        // Predicated region
        $region41: #{tpu_custom_call.1} parent=27 // pred_check
          %p273 = pneg %p224
        $region42: #{tpu_custom_call.1} parent=27 // pred_check_branch
          %275 = sbr.rel (%p273) target = $region44
        $region43: #{tpu_custom_call.1} parent=27 // pred_region
          %v276 = vld [vmem:[#allocation2] sm:$0xff]
          %v277 = vrot.slane %v276, 4
          %v278 = vadd.f32 %v276, %v277
          %v279 = vrot.slane %v278, 2
          %v280 = vadd.f32 %v278, %v279
          %v281 = vrot.slane %v280, 1
          %v282 = vadd.f32 %v280, %v281
          %283 = vadd.xlane.f32.xlu0 %v282
          %v284 = vpop.xlane.xlu0 %283
          %v285 = vld [vmem:[#allocation3] sm:$0xff]
          %v286 = vrot.slane %v285, 4
          %v287 = vadd.f32 %v285, %v286
          %v288 = vrot.slane %v287, 2
          %v289 = vadd.f32 %v287, %v288
          %v290 = vrot.slane %v289, 1
          %v291 = vadd.f32 %v289, %v290
          %292 = vadd.xlane.f32.xlu0 %v291
          %v293 = vpop.xlane.xlu0 %292
          %v294 = vld [vmem:[#allocation4] sm:$0xff]
          %v295 = vrot.slane %v294, 4
          %v296 = vadd.f32 %v294, %v295
          %v297 = vrot.slane %v296, 2
          %v298 = vadd.f32 %v296, %v297
          %v299 = vrot.slane %v298, 1
          %v300 = vadd.f32 %v298, %v299
          %301 = vadd.xlane.f32.xlu0 %v300
          %v302 = vpop.xlane.xlu0 %301
          %v303 = vld [vmem:[#allocation5] sm:$0xff]
          %v304 = vrot.slane %v303, 4
          %v305 = vadd.f32 %v303, %v304
          %v306 = vrot.slane %v305, 2
          %v307 = vadd.f32 %v305, %v306
          %v308 = vrot.slane %v307, 1
          %v309 = vadd.f32 %v307, %v308
          %310 = vadd.xlane.f32.xlu0 %v309
          %v311 = vpop.xlane.xlu0 %310
          %v312 = vld [vmem:[#allocation6] sm:$0xff]
          %v313 = vrot.slane %v312, 4
          %v314 = vadd.f32 %v312, %v313
          %v315 = vrot.slane %v314, 2
          %v316 = vadd.f32 %v314, %v315
          %v317 = vrot.slane %v316, 1
          %v318 = vadd.f32 %v316, %v317
          %319 = vadd.xlane.f32.xlu0 %v318
          %v320 = vpop.xlane.xlu0 %319
          %v321 = vmul.f32 %v284, %v293
          %v322 = vrcp.pop 3000.0
          %v323 = vmul.f32 %v321, %v322
          %v324 = vsub.f32 %v302, %v323
          %v325 = vmul.f32 %v293, %v293
          %v326 = vmul.f32 %v325, %v322
          %v327 = vsub.f32 %v320, %v326
          %v328 = vmul.f32 %v284, %v284
          %v329 = vmul.f32 %v328, %v322
          %v330 = vsub.f32 %v311, %v329
          %v331 = vadd.f32 %v327, 1e-08
          %v332 = vrcp.pop %v331
          %v333 = vmul.f32 %v324, %v332
          %v334 = vmul.f32 %v333, %v333
          %v335 = vmul.f32 %v334, %v327
          %v336 = vmul.f32 %v333, 2.0
          %v337 = vmul.f32 %v336, %v324
          %v338 = vsub.f32 %v330, %v337
          %v339 = vadd.f32 %v338, %v335
          %v340 = vmax.f32 %v335, 0.0
          %v341 = vrsqrt.pop %v340
          %v342 = vmul.f32 %v340, %v341
          %vm343 = vcmp.eq.f32.partialorder %v340, inf
          %v344 = vsel %vm343, %v340, %v342
          %vm345 = vcmp.eq.f32.partialorder %v340, 0.0
          %v346 = vand.u32 %v340, 2147483648
          %v347 = vsel %vm345, %v346, %v344
          %v348 = vmax.f32 %v339, 0.0
          %v349 = vrsqrt.pop %v348
          %v350 = vmul.f32 %v348, %v349
          %vm351 = vcmp.eq.f32.partialorder %v348, inf
          %v352 = vsel %vm351, %v348, %v350
          %vm353 = vcmp.eq.f32.partialorder %v348, 0.0
          %v354 = vand.u32 %v348, 2147483648
          %v355 = vsel %vm353, %v354, %v352
          %v356 = vadd.f32 %v355, 1e-08
          %v357 = vrcp.pop %v356
          %v358 = vmul.f32 %v347, %v357
          %v359 = vadd.f32 %v358, 1e-08
          %v360 = vlog2.pop %v359
          %v361 = vmul.f32 %v360, 0.6931472
          %v362 = vmul.f32 %v361, 0.4342945
          %v363 = vmul.f32 %v362, 20.0
          %364 = vst [vmem:[%s221] sm:$0xff] %v363
        $region44: #{tpu_custom_call.1} parent=27 // pred_fallthru
          _
        %s365 = sand.u32 %s98, 1
        %s366 = scalar_lea.sflag [#allocation9], %s365
        %s367 = sand.u32 %s98, 1
        %s368 = smul.addr %s367, 8
        %s369 = scalar_lea.vmem [#allocation12], %s368
        // Predicated region
        $region45: #{tpu_custom_call.1} parent=27 // pred_check
          %p370 = pneg %p108
        $region46: #{tpu_custom_call.1} parent=27 // pred_check_branch
          %372 = sbr.rel (%p370) target = $region48
        $region47: #{tpu_custom_call.1} parent=27 // pred_region
          %s374 = ssub.s32 128, 128
          %375 = vsyncadd %s366, %s374
          %s376 = smul.addr %s26, 128
          %s377 = scalar_lea.hbm %s2, %s376
          %s379 = sshll.u32 %s369, 4
          %s380 = int_to_ptr.vmem [resolvable:$true] %s379
          %382 = dma.vmem_to_hbm [thread:$0]  %s380, 128, %s377, %s366
        $region48: #{tpu_custom_call.1} parent=27 // pred_fallthru
          _
      $region28: #{tpu_custom_call.1} parent=5 // pred_fallthru
        _
      %p383 = scmp.le.s32.totalorder 2, %s17
      // Predicated region
      $region49: #{tpu_custom_call.1} parent=5 // pred_check
        %p384 = pneg %p383
      $region50: #{tpu_custom_call.1} parent=5 // pred_check_branch
        %386 = sbr.rel (%p384) target = $region52
      $region51: #{tpu_custom_call.1} parent=5 // pred_region
        %s387 = ssub.s32 %s17, 2
        // Predicated region
        $region53: #{tpu_custom_call.1} parent=51 // pred_check
          %p388 = pneg %p114
        $region54: #{tpu_custom_call.1} parent=51 // pred_check_branch
          %390 = sbr.rel (%p388) target = $region56
        $region55: #{tpu_custom_call.1} parent=51 // pred_region
          %s391 = sand.u32 %s99, 1
          %s392 = scalar_lea.sflag [#allocation9], %s391
          %s393 = sand.u32 %s99, 1
          %s394 = smul.addr %s393, 8
          %s395 = scalar_lea.vmem [#allocation12], %s394
          %396 = dma.done %s392, 128
        $region56: #{tpu_custom_call.1} parent=51 // pred_fallthru
          _
      $region52: #{tpu_custom_call.1} parent=5 // pred_fallthru
        _
    $region6: #{tpu_custom_call.1} parent=1 // loop_footer
      %s21 = sadd.s32 1, %s17
    $region7: #{tpu_custom_call.1} parent=1 // loop_footer_branch
      %16 = sbr.rel target = $region3
    $region8: #{tpu_custom_call.1} parent=1 // loop_exit
      _
    %397 = vsyncpa [#allocation8], 1
    %s398 = scalar_lea.sflag [#allocation8], 1
    %399 = vsyncpa %s398, 1
    %400 = vsyncpa [#allocation11], 1
    %s401 = scalar_lea.sflag [#allocation11], 1
    %402 = vsyncpa %s401, 1
    %403 = vsyncpa [#allocation9], 1
    %s404 = scalar_lea.sflag [#allocation9], 1
    %405 = vsyncpa %s404, 1

</llo_original>
